<compile_context>
chip_gen: v6e
topology: v6e:2x2x1
jax: 0.10.0
libtpu: 0.0.40
codegen_flags: <defaults>
</compile_context>

<pallas_src>
import functools

import jax
import jax.numpy as jnp
from jax.experimental import pallas as pl
from jax.experimental.pallas import tpu as pltpu


def _tv_kernel(x_ref, wmask_ref, o_ref, *, L, W, inv_count_h):
    # x_ref: (rows_per_block, L) lane-dense block of flattened images.
    xs = x_ref[...].astype(jnp.float32)

    # Vertical (height) diffs: x[j+W] - x[j]; every j < L - W is valid.
    dh = xs[:, W:] - xs[:, : L - W]
    h_part = jnp.sum(dh * dh) * inv_count_h

    # Horizontal (width) diffs: x[j+1] - x[j]; row-wrap positions
    # (j % W == W-1) are zeroed by the precomputed mask, which already
    # carries inv_count_w (so no post-scaling is needed).
    dw = xs[:, 1:] - xs[:, : L - 1]
    w_part = jnp.sum(dw * dw * wmask_ref[:, : L - 1])

    # Each grid step owns a distinct, fully aligned (1, 8, 128) output tile,
    # so there is no carried accumulator and the grid axis can be "parallel".
    o_ref[...] = jnp.full(o_ref.shape, h_part + w_part, jnp.float32)


def tv_loss_pallas(x: jax.Array, tv_loss_weight: float = 1.0,
                   *, target_block_bytes: int = 2 * 1024 * 1024) -> jax.Array:
    B, C, H, W = x.shape
    if H < 2 or W < 2:
        raise ValueError("TVLoss needs H >= 2 and W >= 2 (count_h/count_w would be 0).")

    R = B * C
    L = H * W
    count_h = C * (H - 1) * W
    count_w = C * H * (W - 1)
    scale = float(tv_loss_weight) * 2.0 / B
    inv_count_h = scale / count_h
    inv_count_w = scale / count_w

    itemsize = jnp.dtype(x.dtype).itemsize
    # Rows (fused (b, c) images) per grid step: a multiple of 8, sized so one
    # input block is ~target_block_bytes, but never more than the (8-rounded)
    # total row count.
    rows_per_block = max(8, (target_block_bytes // max(1, L * itemsize)) // 8 * 8)
    r_ceil8 = ((R + 7) // 8) * 8
    rows_per_block = min(rows_per_block, r_ceil8)
    num_blocks = -(-R // rows_per_block)  # cdiv
    R_pad = num_blocks * rows_per_block
    # TODO(synk): if a single 8-row block (8*H*W*itemsize) no longer fits VMEM
    # (e.g. 4K-video-sized planes), add an H-tiling grid axis that carries the
    # previous tile's last row for the boundary dh.

    xr = x.reshape(R, L)
    if R_pad != R:
        # Zero rows contribute exactly 0 to both diffs, so padding is safe.
        xr = jnp.pad(xr, ((0, R_pad - R), (0, 0)))

    # Mask for the width-diffs in flattened coordinates, with the
    # normalization constant folded in (0 at row-wrap positions).
    col = jnp.arange(L, dtype=jnp.int32)
    w_mask = jnp.where((col % W) != (W - 1),
                       jnp.float32(inv_count_w), jnp.float32(0.0)).reshape(1, L)

    kernel = functools.partial(_tv_kernel, L=L, W=W, inv_count_h=inv_count_h)

    # VMEM budget: input block double-buffered (x2), plus mask / output /
    # compiler scratch headroom.  Clamped to be safe on every generation
    # (v7x has only 64 MiB physical VMEM per TensorCore).
    block_bytes = rows_per_block * L * itemsize
    vmem_limit = int(min(64 * 1024 * 1024,
                         max(16 * 1024 * 1024, 4 * block_bytes + (2 << 20))))

    partials = pl.pallas_call(
        kernel,
        out_shape=jax.ShapeDtypeStruct((num_blocks, 8, 128), jnp.float32),
        grid_spec=pltpu.PrefetchScalarGridSpec(
            num_scalar_prefetch=0,
            grid=(num_blocks,),
            in_specs=[
                pl.BlockSpec((rows_per_block, L), lambda i: (i, 0)),
                pl.BlockSpec((1, L), lambda i: (0, 0)),  # mask: resident (same block)
            ],
            out_specs=pl.BlockSpec((1, 8, 128), lambda i: (i, 0, 0)),
        ),
        compiler_params=pltpu.CompilerParams(
            dimension_semantics=("parallel",),
            vmem_limit_bytes=vmem_limit,
        ),
        cost_estimate=pl.CostEstimate(
            flops=7 * R * L,
            transcendentals=0,
            bytes_accessed=R_pad * L * itemsize + L * 4 + num_blocks * 8 * 128 * 4,
        ),
    )(xr, w_mask)

    # Tiny final reduction over per-block partials (each already normalized).
    return jnp.sum(partials[:, 0, 0])


def tv_loss_ref(x: jax.Array, tv_loss_weight: float = 1.0) -> jax.Array:
    # Pure-JAX reference mirroring the PyTorch forward exactly.
    B, C, H, W = x.shape
    count_h = C * (H - 1) * W
    count_w = C * H * (W - 1)
    xf = x.astype(jnp.float32)
    h_tv = jnp.sum((xf[:, :, 1:, :] - xf[:, :, : H - 1, :]) ** 2)
    w_tv = jnp.sum((xf[:, :, :, 1:] - xf[:, :, :, : W - 1]) ** 2)
    return tv_loss_weight * 2.0 * (h_tv / count_h + w_tv / count_w) / B


if __name__ == "__main__":
    key = jax.random.PRNGKey(0)
    x = jax.random.normal(key, (2, 4, 16, 16), dtype=jnp.float32)

    loss = tv_loss_pallas(x, tv_loss_weight=1.0)
    loss = jax.block_until_ready(loss)

    ref = tv_loss_ref(x, tv_loss_weight=1.0)
    assert jnp.allclose(loss, ref, rtol=1e-5, atol=1e-5), (loss, ref)

    print("KERNEL_OK")
</pallas_src>

<mosaic_0001>
module attributes {stable_mosaic.version = 11 : i64} {
  func.func @_tv_kernel(%arg0: i32, %arg1: memref<8x256xf32, #tpu.memory_space<vmem>>, %arg2: memref<1x256xf32, #tpu.memory_space<vmem>>, %arg3: memref<1x8x128xf32, #tpu.memory_space<vmem>>) attributes {dimension_semantics = [#tpu.dimension_semantics<parallel>], iteration_bounds = array<i64: 1>, scalar_prefetch = 0 : i64, scratch_operands = 0 : i64, tpu.core_type = #tpu.core_type<tc>, window_params = [{transform_indices = @transform_0, window_bounds = array<i64: 8, 256>}, {pipeline_mode = #tpu.pipeline_mode<synchronous>, transform_indices = @transform_1, window_bounds = array<i64: 1, 256>}, {transform_indices = @transform_2, window_bounds = array<i64: 1, 8, 128>}]} {
    %c0 = arith.constant 0 : index
    %c0_0 = arith.constant 0 : index
    %0 = vector.load %arg1[%c0, %c0_0] : memref<8x256xf32, #tpu.memory_space<vmem>>, vector<8x256xf32>
    %1 = vector.extract_strided_slice %0 {offsets = [0, 16], sizes = [8, 240], strides = [1, 1]} : vector<8x256xf32> to vector<8x240xf32>
    %2 = vector.extract_strided_slice %0 {offsets = [0, 0], sizes = [8, 240], strides = [1, 1]} : vector<8x256xf32> to vector<8x240xf32>
    %3 = arith.subf %1, %2 : vector<8x240xf32>
    %4 = arith.mulf %3, %3 : vector<8x240xf32>
    %5 = vector.shape_cast %4 : vector<8x240xf32> to vector<1x8x240xf32>
    %cst = arith.constant dense<0.000000e+00> : vector<1xf32>
    %6 = vector.multi_reduction <add>, %5, %cst [1, 2] : vector<1x8x240xf32> to vector<1xf32>
    %7 = vector.shape_cast %6 : vector<1xf32> to vector<1x1x1xf32>
    %8 = vector.extract %7[0, 0, 0] : f32 from vector<1x1x1xf32>
    %cst_1 = arith.constant 0.00104166672 : f32
    %9 = arith.mulf %8, %cst_1 : f32
    %10 = vector.extract_strided_slice %0 {offsets = [0, 1], sizes = [8, 255], strides = [1, 1]} : vector<8x256xf32> to vector<8x255xf32>
    %11 = vector.extract_strided_slice %0 {offsets = [0, 0], sizes = [8, 255], strides = [1, 1]} : vector<8x256xf32> to vector<8x255xf32>
    %12 = arith.subf %10, %11 : vector<8x255xf32>
    %13 = arith.mulf %12, %12 : vector<8x255xf32>
    %c0_2 = arith.constant 0 : index
    %c0_3 = arith.constant 0 : index
    %14 = vector.load %arg2[%c0_2, %c0_3] : memref<1x256xf32, #tpu.memory_space<vmem>>, vector<1x255xf32>
    %15 = vector.broadcast %14 : vector<1x255xf32> to vector<8x255xf32>
    %16 = arith.mulf %13, %15 : vector<8x255xf32>
    %17 = vector.shape_cast %16 : vector<8x255xf32> to vector<1x8x255xf32>
    %cst_4 = arith.constant dense<0.000000e+00> : vector<1xf32>
    %18 = vector.multi_reduction <add>, %17, %cst_4 [1, 2] : vector<1x8x255xf32> to vector<1xf32>
    %19 = vector.shape_cast %18 : vector<1xf32> to vector<1x1x1xf32>
    %20 = vector.extract %19[0, 0, 0] : f32 from vector<1x1x1xf32>
    %21 = arith.addf %9, %20 : f32
    %22 = vector.broadcast %21 : f32 to vector<1x8x128xf32>
    %c0_5 = arith.constant 0 : index
    %c0_6 = arith.constant 0 : index
    %c0_7 = arith.constant 0 : index
    %23 = vector.load %arg3[%c0_5, %c0_6, %c0_7] : memref<1x8x128xf32, #tpu.memory_space<vmem>>, vector<1x8x128xf32>
    tpu.vector_store %arg3[%c0_5, %c0_6, %c0_7], %22 {strides = array<i32>} : memref<1x8x128xf32, #tpu.memory_space<vmem>>, vector<1x8x128xf32>,
    return
  }
  func.func @transform_0(%arg0: i32) -> (i32, i32) {
    %c0_i32 = arith.constant 0 : i32
    %c0_i32_0 = arith.constant 0 : i32
    return %arg0, %c0_i32 : i32, i32
  }
  func.func @transform_1(%arg0: i32) -> (i32, i32) {
    %c0_i32 = arith.constant 0 : i32
    %c0_i32_0 = arith.constant 0 : i32
    %c0_i32_1 = arith.constant 0 : i32
    return %c0_i32, %c0_i32_0 : i32, i32
  }
  func.func @transform_2(%arg0: i32) -> (i32, i32, i32) {
    %c0_i32 = arith.constant 0 : i32
    %c0_i32_0 = arith.constant 0 : i32
    %c0_i32_1 = arith.constant 0 : i32
    return %arg0, %c0_i32, %c0_i32_0 : i32, i32, i32
  }
}

</mosaic_0001>

<llo_original>
// kernel: tpu_custom_call.1
$region0: #{tpu_custom_call.1}
  #allocation0 [shape = 'u32[]', space=smem, size = 0x4, offset = 0x4, fixed_abs, tag = 'smem constant byte address 0x4 - core index']
  #allocation1 [shape = 'u32[144,128]{1,0:T(1,128)}', space=vmem, size = 0x12000, scoped, tag = 'internal scratch']
  %s0 = inlined_call_operand.hbm [shape: f32[8,256], index: 0, kind: input, shape index: {}]
  %s1 = inlined_call_operand.hbm [shape: f32[1,256], index: 1, kind: input, shape index: {}]
  %s2 = inlined_call_operand.hbm [shape: f32[1,8,128], index: 2, kind: output, shape index: {}]
  %s3 = sld [smem:[#allocation0]]
  $region26: #{tpu_custom_call.1} parent=0
    _
  %s5 = ssub.s32 1, %s3
  %s6 = scalar_select 0, %s5, %s3
  $region1: #{tpu_custom_call.1} parent=0
    #allocation2 [shape = 'u8[8192]{0}', space=vmem, size = 0x2000, scoped, tag = 'input window, operand 0, single buffered']
    #allocation3 [shape = 's32[1]{0}', space=sflag, size = 0x4, scoped, tag = 'scoped memory for tpu_custom_call.1']
    #allocation4 [shape = 's32[1]{0}', space=sflag, size = 0x4, scoped, tag = 'scoped memory for tpu_custom_call.1']
    #allocation5 [shape = 'u8[1024]{0}', space=vmem, size = 0x400, scoped, tag = 'input window, operand 1, single buffered']
    #allocation6 [shape = 's32[1]{0}', space=sflag, size = 0x4, scoped, tag = 'scoped memory for tpu_custom_call.1']
    #allocation7 [shape = 'u8[4096]{0}', space=vmem, size = 0x1000, scoped, tag = 'output window, operand 0, single buffered']
    %7 = vsyncpa [#allocation3], 0
    %8 = vsyncpa [#allocation6], 0
    %9 = vsyncpa [#allocation4], 0
    // Predicated region
    $region2: #{tpu_custom_call.1} parent=1 // pred_check
      _
    $region3: #{tpu_custom_call.1} parent=1 // pred_check_branch
      %11 = sbr.rel (0) target = $region5
    $region4: #{tpu_custom_call.1} parent=1 // pred_region
      %s13 = ssub.s32 256, 256
      %14 = vsyncadd [#allocation3], %s13
      %s16 = sshll.u32 [#allocation2], 4
      %s17 = int_to_ptr.vmem [resolvable:$true] %s16
      %19 = dma.hbm_to_vmem [thread:$0]  %s0, 256, %s17, [#allocation3]
    $region5: #{tpu_custom_call.1} parent=1 // pred_fallthru
      _
    // Predicated region
    $region6: #{tpu_custom_call.1} parent=1 // pred_check
      _
    $region7: #{tpu_custom_call.1} parent=1 // pred_check_branch
      %21 = sbr.rel (0) target = $region9
    $region8: #{tpu_custom_call.1} parent=1 // pred_region
      %s23 = ssub.s32 32, 32
      %24 = vsyncadd [#allocation6], %s23
      %s26 = sshll.u32 [#allocation5], 4
      %s27 = int_to_ptr.vmem [resolvable:$true] %s26
      %29 = dma.hbm_to_vmem [thread:$0]  %s1, 32, %s27, [#allocation6]
    $region9: #{tpu_custom_call.1} parent=1 // pred_fallthru
      _
    // Predicated region
    $region10: #{tpu_custom_call.1} parent=1 // pred_check
      _
    $region11: #{tpu_custom_call.1} parent=1 // pred_check_branch
      %31 = sbr.rel (0) target = $region13
    $region12: #{tpu_custom_call.1} parent=1 // pred_region
      %32 = dma.done [#allocation3], 256
    $region13: #{tpu_custom_call.1} parent=1 // pred_fallthru
      _
    // Predicated region
    $region14: #{tpu_custom_call.1} parent=1 // pred_check
      _
    $region15: #{tpu_custom_call.1} parent=1 // pred_check_branch
      %34 = sbr.rel (0) target = $region17
    $region16: #{tpu_custom_call.1} parent=1 // pred_region
      %35 = dma.done [#allocation6], 32
    $region17: #{tpu_custom_call.1} parent=1 // pred_fallthru
      _
    %v36 = vld [vmem:[#allocation2] sm:$0xff]
    %v37 = vld [vmem:[#allocation2 + $0x8] sm:$0xff]
    %40 = vrot.lane.b32.xlu0 %v36, 16
    %v41 = vpop.permute.xlu0 %40
    %42 = vrot.lane.b32.xlu0 %v37, 16
    %v43 = vpop.permute.xlu0 %42
    %vm44 = vcmask 130048
    %v45 = vsel %vm44, %v41, %v43
    %v48 = vsub.f32 %v36, %v41
    %v49 = vsub.f32 %v37, %v45
    %v50 = vmul.f32 %v48, %v48
    %v51 = vmul.f32 %v49, %v49
    %54 = vrot.lane.b32.xlu0 %v50, 112
    %v55 = vpop.permute.xlu0 %54
    %56 = vrot.lane.b32.xlu0 %v51, 112
    %v57 = vpop.permute.xlu0 %56
    %vm58 = vcmask 916480
    %v59 = vsel %vm58, %v55, %v57
    %v62 = vsel %vm58, %v57, 0.0
    %v63 = vadd.f32 %v59, %v62
    %64 = vadd.xlane.f32.xlu0 %v63
    %v65 = vpop.xlane.xlu0 %64
    %v66 = vrot.slane %v65, 4
    %v67 = vadd.f32 %v65, %v66
    %v68 = vrot.slane %v67, 2
    %v69 = vadd.f32 %v67, %v68
    %v70 = vrot.slane %v69, 1
    %v71 = vadd.f32 %v69, %v70
    %s72 = vtos %v71
    %s73 = smul.f32 %s72, 0.0010416667
    %74 = vrot.lane.b32.xlu0 %v36, 1
    %v75 = vpop.permute.xlu0 %74
    %76 = vrot.lane.b32.xlu0 %v37, 1
    %v77 = vpop.permute.xlu0 %76
    %vm78 = vcmask 7168
    %v79 = vsel %vm78, %v75, %v77
    %v82 = vsub.f32 %v36, %v75
    %v83 = vsub.f32 %v37, %v79
    %v84 = vmul.f32 %v82, %v82
    %v85 = vmul.f32 %v83, %v83
    %v86 = vld [vmem:[#allocation5] sm:$0x3]
    %v88 = vlaneseq
    %v89 = vshrl.u32 %v88, 7
    %v90 = vsub.s32 0, %v89
    %v91 = vrot.slane %v86, %v90
    %v92 = vlaneseq
    %v93 = vshrl.u32 %v92, 7
    %v94 = vsub.s32 1, %v93
    %v95 = vrot.slane %v86, %v94
    %96 = vrot.lane.b32.xlu0 %v91, 1
    %v97 = vpop.permute.xlu0 %96
    %98 = vrot.lane.b32.xlu0 %v95, 1
    %v99 = vpop.permute.xlu0 %98
    %v100 = vsel %vm78, %v97, %v99
    %v103 = vmul.f32 %v84, %v97
    %v104 = vmul.f32 %v85, %v100
    %107 = vrot.lane.b32.xlu0 %v103, 127
    %v108 = vpop.permute.xlu0 %107
    %109 = vrot.lane.b32.xlu0 %v104, 127
    %v110 = vpop.permute.xlu0 %109
    %vm111 = vcmask 1039360
    %v112 = vsel %vm111, %v108, %v110
    %v115 = vsel %vm111, %v110, 0.0
    %v116 = vadd.f32 %v112, %v115
    %117 = vadd.xlane.f32.xlu0 %v116
    %v118 = vpop.xlane.xlu0 %117
    %v119 = vrot.slane %v118, 4
    %v120 = vadd.f32 %v118, %v119
    %v121 = vrot.slane %v120, 2
    %v122 = vadd.f32 %v120, %v121
    %v123 = vrot.slane %v122, 1
    %v124 = vadd.f32 %v122, %v123
    %s125 = vtos %v124
    %s126 = sadd.f32 %s73, %s125
    %v127 = vstv %s126
    %128 = vst [vmem:[#allocation7] sm:$0xff] %v127
    // Predicated region
    $region18: #{tpu_custom_call.1} parent=1 // pred_check
      _
    $region19: #{tpu_custom_call.1} parent=1 // pred_check_branch
      %130 = sbr.rel (0) target = $region21
    $region20: #{tpu_custom_call.1} parent=1 // pred_region
      %s132 = ssub.s32 128, 128
      %133 = vsyncadd [#allocation4], %s132
      %s135 = sshll.u32 [#allocation7], 4
      %s136 = int_to_ptr.vmem [resolvable:$true] %s135
      %138 = dma.vmem_to_hbm [thread:$0]  %s136, 128, %s2, [#allocation4]
    $region21: #{tpu_custom_call.1} parent=1 // pred_fallthru
      _
    // Predicated region
    $region22: #{tpu_custom_call.1} parent=1 // pred_check
      _
    $region23: #{tpu_custom_call.1} parent=1 // pred_check_branch
      %140 = sbr.rel (0) target = $region25
    $region24: #{tpu_custom_call.1} parent=1 // pred_region
      %141 = dma.done [#allocation4], 128
    $region25: #{tpu_custom_call.1} parent=1 // pred_fallthru
      _
    %142 = vsyncpa [#allocation3], 1
    %143 = vsyncpa [#allocation6], 1
    %144 = vsyncpa [#allocation4], 1

</llo_original>
